<compile_context>
chip_gen: v7x
topology: tpu7x:2x2x1
jax: 0.10.0
libtpu: 0.0.40
codegen_flags: <defaults>
</compile_context>

<pallas_src>
import functools

import jax
import jax.numpy as jnp
from jax.experimental import pallas as pl
from jax.experimental.pallas import tpu as pltpu

NUM_HEADS = 4


# ---------------------------------------------------------------------------
# Kernel: one grid step == one DynamicMemoryCell.forward (context=None)
# ---------------------------------------------------------------------------
def dmc_kernel(
    x_ref, h0_ref,               # activations: (1, B, in) / (B, dm), f32
    wx_ref, bx_ref,              # stacked matmul  (in+dm, 4*dm) bf16 / (1, 4*dm) f32
    whh_ref, bhh_ref,            # GRU hidden side (dm, 3*dm) bf16 / (1, 3*dm) f32
    wog_ref, bog_ref,            # output gate     (dm, dm)   bf16 / (1, dm)   f32
    out_ref,                     # (1, B, dm) f32
    h_scr,                       # VMEM scratch (B, dm) f32 — carried memory
    *, dm,
):
    t = pl.program_id(0)

    @pl.when(t == 0)
    def _():
        h_scr[...] = h0_ref[...]

    x32 = x_ref[0]                       # (B, input_dim)
    h32 = h_scr[...]                     # (B, dm)  previous_memory
    xb = x32.astype(jnp.bfloat16)
    hb = h32.astype(jnp.bfloat16)

    # ---- stage 1: ONE stacked matmul --------------------------------------
    #   [x | h] @ wx -> [ gi_r | gi_z | gi_n | forget (x-part + h-part) ]
    lhs = jnp.concatenate([xb, hb], axis=-1)                       # (B, in+dm)
    xh = jnp.dot(lhs, wx_ref[...],
                 preferred_element_type=jnp.float32) + bx_ref[...]  # (B, 4*dm)

    forget = jax.nn.sigmoid(xh[:, 3 * dm:4 * dm])
    gated_memory = h32 * forget                                     # f32

    # ---- stage 2: GRU hidden-side matmul on gated memory -------------------
    gh = jnp.dot(gated_memory.astype(jnp.bfloat16), whh_ref[...],
                 preferred_element_type=jnp.float32) + bhh_ref[...]  # (B, 3*dm)

    r = jax.nn.sigmoid(xh[:, 0:dm] + gh[:, 0:dm])
    z = jax.nn.sigmoid(xh[:, dm:2 * dm] + gh[:, dm:2 * dm])
    n = jnp.tanh(xh[:, 2 * dm:3 * dm] + r * gh[:, 2 * dm:3 * dm])
    new_h = (1.0 - z) * n + z * gated_memory

    # ---- stage 3: output gate ----------------------------------------------
    og = jax.nn.sigmoid(
        jnp.dot(new_h.astype(jnp.bfloat16), wog_ref[...],
                preferred_element_type=jnp.float32) + bog_ref[...])
    gated_out = new_h * og

    out_ref[0] = gated_out.astype(out_ref.dtype)
    # Carried recurrence: the module's first return value fed back as
    # previous_memory (the only recurrence the module's API allows).
    h_scr[...] = gated_out


# ---------------------------------------------------------------------------
# Wrappers
# ---------------------------------------------------------------------------
def dynamic_memory_cell_scan(xs, h0, packed):
    """T recurrent forward steps inside ONE pallas_call.

    xs: (T, B, input_dim), h0: (B, memory_dim).
    Returns (gated_outputs (T, B, memory_dim), attention_weights (T, B, 1, 1)).
    """
    T, B, input_dim = xs.shape
    dm = h0.shape[1]

    wx, bx = packed["wx"], packed["bx"]
    whh, bhh = packed["whh"], packed["bhh"]
    wog, bog = packed["wog"], packed["bog"]

    def const_spec(a):
        # Whole array in VMEM; block index never changes -> DMA'd exactly once
        # and resident for all T grid steps.
        zeros = (0,) * a.ndim
        return pl.BlockSpec(a.shape, lambda t, _z=zeros: _z)

    in_specs = [
        pl.BlockSpec((1, B, input_dim), lambda t: (t, 0, 0)),   # x_t per step
        pl.BlockSpec((B, dm), lambda t: (0, 0)),                # h0
        const_spec(wx), const_spec(bx),
        const_spec(whh), const_spec(bhh),
        const_spec(wog), const_spec(bog),
    ]
    out_spec = pl.BlockSpec((1, B, dm), lambda t: (t, 0, 0))

    flops = 2 * T * B * ((input_dim + dm) * 4 * dm + dm * 3 * dm + dm * dm)
    transcendentals = 5 * T * B * dm   # forget, r, z, og sigmoids + n tanh
    bytes_accessed = (xs.size * 4 + h0.size * 4 + T * B * dm * 4
                      + sum(int(a.size) * a.dtype.itemsize
                            for a in (wx, bx, whh, bhh, wog, bog)))

    out = pl.pallas_call(
        functools.partial(dmc_kernel, dm=dm),
        grid=(T,),
        in_specs=in_specs,
        out_specs=out_spec,
        out_shape=jax.ShapeDtypeStruct((T, B, dm), jnp.float32),
        scratch_shapes=[pltpu.VMEM((B, dm), jnp.float32)],
        compiler_params=pltpu.CompilerParams(
            dimension_semantics=("arbitrary",)),   # sequential recurrence
        cost_estimate=pl.CostEstimate(
            flops=flops,
            transcendentals=transcendentals,
            bytes_accessed=bytes_accessed),
    )(xs, h0, wx, bx, whh, bhh, wog, bog)

    # MHA with a single key position: softmax == 1 exactly, so the averaged
    # attention weights are ones of shape (N, L, S) = (B, 1, 1) per step.
    attn = jnp.ones((T, B, 1, 1), jnp.float32)
    return out, attn


def dynamic_memory_cell(x, h, packed):
    """Single-step forward, matching DynamicMemoryCell.forward(x, h, context=None)."""
    out, attn = dynamic_memory_cell_scan(x[None], h, packed)
    return out[0], attn[0]


# ---------------------------------------------------------------------------
# Parameter construction / packing
# ---------------------------------------------------------------------------
def make_params(key, input_dim, memory_dim, context_dim):
    """Deterministic synthetic parameters, stored pre-transposed (in, out)."""
    assert context_dim % NUM_HEADS == 0
    assert input_dim == context_dim, "module is only shape-consistent if input_dim == context_dim"
    ks = list(jax.random.split(key, 15))

    def w(k, shape, scale=0.1):
        return (scale * jax.random.normal(k, shape)).astype(jnp.float32)

    E = context_dim
    return {
        # Linear(input_dim -> context_dim)
        "w_ip": w(ks[0], (input_dim, E)), "b_ip": w(ks[1], (1, E)),
        # MHA value / out projections (q, k, memory_projection are dead code)
        "wv": w(ks[2], (E, E)), "bv": w(ks[3], (1, E)),
        "wo": w(ks[4], (E, E)), "bo": w(ks[5], (1, E)),
        # forget gate Linear(memory_dim + input_dim -> memory_dim), split [h | x]
        "wfh": w(ks[6], (memory_dim, memory_dim)),
        "wfx": w(ks[7], (input_dim, memory_dim)),
        "bf": w(ks[8], (1, memory_dim)),
        # GRUCell weights (r, z, n concatenated on the out axis)
        "wih": w(ks[9], (input_dim, 3 * memory_dim)),
        "bih": w(ks[10], (1, 3 * memory_dim)),
        "whh": w(ks[11], (memory_dim, 3 * memory_dim)),
        "bhh": w(ks[12], (1, 3 * memory_dim)),
        # output gate Linear(memory_dim -> memory_dim)
        "wog": w(ks[13], (memory_dim, memory_dim)),
        "bog": w(ks[14], (1, memory_dim)),
    }


def pack_params(raw):
    """Constant-fold the dead-attention chain and pack to a dense, stacked layout."""
    w_ip, b_ip = raw["w_ip"], raw["b_ip"]
    wv, bv, wo, bo = raw["wv"], raw["bv"], raw["wo"], raw["bo"]
    wih, bih = raw["wih"], raw["bih"]
    whh, bhh = raw["whh"], raw["bhh"]
    wfh, wfx, bf = raw["wfh"], raw["wfx"], raw["bf"]
    wog, bog = raw["wog"], raw["bog"]

    input_dim = w_ip.shape[0]
    dm = wfh.shape[0]

    # Fold (f32, eval mode — no dropout / masking):
    #   context_aware = x @ (w_ip @ wv @ wo) + ((b_ip @ wv + bv) @ wo + bo)
    #   gi            = context_aware @ wih + bih
    w_ctx = w_ip @ wv @ wo                         # (input_dim, E)
    b_ctx = (b_ip @ wv + bv) @ wo + bo             # (1, E)
    w_gi = w_ctx @ wih                             # (input_dim, 3*dm)
    b_gi = b_ctx @ wih + bih                       # (1, 3*dm)

    # Stacked-LHS packed matmul, dense gate layout (no 128-lane zero padding):
    #   LHS rows = [ x (input_dim) | h (dm) ]
    #   RHS cols = [ gi_r | gi_z | gi_n | forget ]   (each of width dm)
    wx = jnp.zeros((input_dim + dm, 4 * dm), jnp.float32)
    wx = wx.at[:input_dim, :3 * dm].set(w_gi)      # x -> GRU input side
    wx = wx.at[:input_dim, 3 * dm:].set(wfx)       # x -> forget gate
    wx = wx.at[input_dim:, 3 * dm:].set(wfh)       # h -> forget gate (fused matmul)
    bx = jnp.concatenate([b_gi, bf], axis=1)       # (1, 4*dm)

    bf16 = jnp.bfloat16
    return {
        "wx": wx.astype(bf16), "bx": bx,
        "whh": whh.astype(bf16), "bhh": bhh,
        "wog": wog.astype(bf16), "bog": bog,
    }


# ---------------------------------------------------------------------------
# Pure-JAX reference (un-fused, f32) — mirrors the PyTorch forward
# ---------------------------------------------------------------------------
def reference_step(x, h, p):
    dm = h.shape[1]
    pi = x @ p["w_ip"] + p["b_ip"]
    # MHA with L = S = 1: softmax over a single key is exactly 1 ->
    # attn_output == out_proj(value_proj(context)), weights are ones (B, 1, 1).
    v = pi @ p["wv"] + p["bv"]
    context_aware = v @ p["wo"] + p["bo"]

    forget = jax.nn.sigmoid(h @ p["wfh"] + x @ p["wfx"] + p["bf"])
    gm = h * forget
    gi = context_aware @ p["wih"] + p["bih"]
    gh = gm @ p["whh"] + p["bhh"]
    r = jax.nn.sigmoid(gi[:, :dm] + gh[:, :dm])
    z = jax.nn.sigmoid(gi[:, dm:2 * dm] + gh[:, dm:2 * dm])
    n = jnp.tanh(gi[:, 2 * dm:] + r * gh[:, 2 * dm:])
    new_h = (1.0 - z) * n + z * gm
    og = jax.nn.sigmoid(new_h @ p["wog"] + p["bog"])
    return new_h * og, jnp.ones((x.shape[0], 1, 1), jnp.float32)


def reference_scan(xs, h0, p):
    h = h0
    outs, attns = [], []
    for t in range(xs.shape[0]):
        h, a = reference_step(xs[t], h, p)
        outs.append(h)
        attns.append(a)
    return jnp.stack(outs), jnp.stack(attns)


if __name__ == "__main__":
    T = 4
    B = 8
    input_dim = 64
    context_dim = 64   # must equal input_dim for the module to be shape-consistent
    memory_dim = 32

    key = jax.random.PRNGKey(0)
    k_x, k_h, k_p = jax.random.split(key, 3)
    xs = jax.random.normal(k_x, (T, B, input_dim), jnp.float32)
    h0 = jax.random.normal(k_h, (B, memory_dim), jnp.float32)

    raw = make_params(k_p, input_dim, memory_dim, context_dim)
    packed = pack_params(raw)

    # ---- single step: exactly one DynamicMemoryCell.forward -----------------
    out1, attn1 = dynamic_memory_cell(xs[0], h0, packed)
    out1 = jax.block_until_ready(out1)
    ref1, rattn1 = reference_step(xs[0], h0, raw)
    assert out1.shape == (B, memory_dim) and attn1.shape == (B, 1, 1)
    err1 = float(jnp.max(jnp.abs(out1 - ref1)))
    assert jnp.allclose(out1, ref1, rtol=2e-2, atol=2e-2), err1
    assert jnp.allclose(attn1, rattn1, rtol=1e-6, atol=1e-6)

    # ---- T recurrent steps in one pallas_call (weights VMEM-resident) -------
    out, attn = dynamic_memory_cell_scan(xs, h0, packed)
    out = jax.block_until_ready(out)
    attn = jax.block_until_ready(attn)
    ref, rattn = reference_scan(xs, h0, raw)
    assert out.shape == (T, B, memory_dim) and attn.shape == (T, B, 1, 1)
    err = float(jnp.max(jnp.abs(out - ref)))
    # bf16 weights / matmul activations, f32 accumulation, T steps -> loose tol
    assert jnp.allclose(out, ref, rtol=3e-2, atol=3e-2), err
    assert jnp.allclose(attn, rattn, rtol=1e-6, atol=1e-6)

    print("KERNEL_OK")
</pallas_src>

<mosaic_0001>
module attributes {stable_mosaic.version = 11 : i64} {
  func.func @dmc_kernel(%arg0: i32, %arg1: memref<1x8x64xf32, #tpu.memory_space<vmem>>, %arg2: memref<8x32xf32, #tpu.memory_space<vmem>>, %arg3: memref<96x128xbf16, #tpu.memory_space<vmem>>, %arg4: memref<1x128xf32, #tpu.memory_space<vmem>>, %arg5: memref<32x96xbf16, #tpu.memory_space<vmem>>, %arg6: memref<1x96xf32, #tpu.memory_space<vmem>>, %arg7: memref<32x32xbf16, #tpu.memory_space<vmem>>, %arg8: memref<1x32xf32, #tpu.memory_space<vmem>>, %arg9: memref<1x8x32xf32, #tpu.memory_space<vmem>>, %arg10: memref<8x32xf32, #tpu.memory_space<vmem>>) attributes {dimension_semantics = [#tpu.dimension_semantics<arbitrary>], iteration_bounds = array<i64: 1>, scalar_prefetch = 0 : i64, scratch_operands = 1 : i64, tpu.core_type = #tpu.core_type<tc>, window_params = [{transform_indices = @transform_0, window_bounds = array<i64: 1, 8, 64>}, {pipeline_mode = #tpu.pipeline_mode<synchronous>, transform_indices = @transform_1, window_bounds = array<i64: 8, 32>}, {pipeline_mode = #tpu.pipeline_mode<synchronous>, transform_indices = @transform_2, window_bounds = array<i64: 96, 128>}, {pipeline_mode = #tpu.pipeline_mode<synchronous>, transform_indices = @transform_3, window_bounds = array<i64: 1, 128>}, {pipeline_mode = #tpu.pipeline_mode<synchronous>, transform_indices = @transform_4, window_bounds = array<i64: 32, 96>}, {pipeline_mode = #tpu.pipeline_mode<synchronous>, transform_indices = @transform_5, window_bounds = array<i64: 1, 96>}, {pipeline_mode = #tpu.pipeline_mode<synchronous>, transform_indices = @transform_6, window_bounds = array<i64: 32, 32>}, {pipeline_mode = #tpu.pipeline_mode<synchronous>, transform_indices = @transform_7, window_bounds = array<i64: 1, 32>}, {transform_indices = @transform_8, window_bounds = array<i64: 1, 8, 32>}]} {
    %c0_i32 = arith.constant 0 : i32
    %0 = arith.cmpi eq, %arg0, %c0_i32 : i32
    %1 = arith.extui %0 : i1 to i32
    %c0_i32_0 = arith.constant 0 : i32
    %2 = arith.cmpi ne, %1, %c0_i32_0 : i32
    scf.if %2 {
      %c0_29 = arith.constant 0 : index
      %c0_30 = arith.constant 0 : index
      %69 = vector.load %arg2[%c0_29, %c0_30] : memref<8x32xf32, #tpu.memory_space<vmem>>, vector<8x32xf32>
      %c0_31 = arith.constant 0 : index
      %c0_32 = arith.constant 0 : index
      %70 = vector.load %arg10[%c0_31, %c0_32] : memref<8x32xf32, #tpu.memory_space<vmem>>, vector<8x32xf32>
      tpu.vector_store %arg10[%c0_31, %c0_32], %69 {strides = array<i32>} : memref<8x32xf32, #tpu.memory_space<vmem>>, vector<8x32xf32>,
    } else {
    }
    %c0 = arith.constant 0 : index
    %c0_1 = arith.constant 0 : index
    %c0_2 = arith.constant 0 : index
    %3 = vector.load %arg1[%c0, %c0_1, %c0_2] : memref<1x8x64xf32, #tpu.memory_space<vmem>>, vector<1x8x64xf32>
    %4 = vector.shape_cast %3 : vector<1x8x64xf32> to vector<8x64xf32>
    %c0_3 = arith.constant 0 : index
    %c0_4 = arith.constant 0 : index
    %5 = vector.load %arg10[%c0_3, %c0_4] : memref<8x32xf32, #tpu.memory_space<vmem>>, vector<8x32xf32>
    %6 = arith.truncf %4 : vector<8x64xf32> to vector<8x64xbf16>
    %7 = arith.truncf %5 : vector<8x32xf32> to vector<8x32xbf16>
    %8 = tpu.concatenate %6, %7 in 1 : vector<8x64xbf16>, vector<8x32xbf16> -> vector<8x96xbf16>
    %c0_5 = arith.constant 0 : index
    %c0_6 = arith.constant 0 : index
    %9 = vector.load %arg3[%c0_5, %c0_6] : memref<96x128xbf16, #tpu.memory_space<vmem>>, vector<96x128xbf16>
    %cst = arith.constant dense<0.000000e+00> : vector<8x128xf32>
    %10 = tpu.matmul %8, %9, %cst {dimension_numbers = #tpu.dot_dimension_numbers<[1], [0], [0], [1], [0, 0, 1, 1], [], []>} : vector<8x96xbf16>, vector<96x128xbf16>, vector<8x128xf32> -> vector<8x128xf32>
    %c0_7 = arith.constant 0 : index
    %c0_8 = arith.constant 0 : index
    %11 = vector.load %arg4[%c0_7, %c0_8] : memref<1x128xf32, #tpu.memory_space<vmem>>, vector<1x128xf32>
    %12 = vector.broadcast %11 : vector<1x128xf32> to vector<8x128xf32>
    %13 = arith.addf %10, %12 : vector<8x128xf32>
    %14 = vector.extract_strided_slice %13 {offsets = [0, 96], sizes = [8, 32], strides = [1, 1]} : vector<8x128xf32> to vector<8x32xf32>
    %15 = arith.negf %14 : vector<8x32xf32>
    %16 = math.exp %15 : vector<8x32xf32>
    %cst_9 = arith.constant 1.000000e+00 : f32
    %17 = vector.broadcast %cst_9 : f32 to vector<8x32xf32>
    %18 = arith.addf %17, %16 : vector<8x32xf32>
    %19 = arith.divf %17, %18 : vector<8x32xf32>
    %20 = arith.mulf %5, %19 : vector<8x32xf32>
    %21 = arith.truncf %20 : vector<8x32xf32> to vector<8x32xbf16>
    %c0_10 = arith.constant 0 : index
    %c0_11 = arith.constant 0 : index
    %22 = vector.load %arg5[%c0_10, %c0_11] : memref<32x96xbf16, #tpu.memory_space<vmem>>, vector<32x96xbf16>
    %cst_12 = arith.constant dense<0.000000e+00> : vector<8x96xf32>
    %23 = tpu.matmul %21, %22, %cst_12 {dimension_numbers = #tpu.dot_dimension_numbers<[1], [0], [0], [1], [0, 0, 1, 1], [], []>} : vector<8x32xbf16>, vector<32x96xbf16>, vector<8x96xf32> -> vector<8x96xf32>
    %c0_13 = arith.constant 0 : index
    %c0_14 = arith.constant 0 : index
    %24 = vector.load %arg6[%c0_13, %c0_14] : memref<1x96xf32, #tpu.memory_space<vmem>>, vector<1x96xf32>
    %25 = vector.broadcast %24 : vector<1x96xf32> to vector<8x96xf32>
    %26 = arith.addf %23, %25 : vector<8x96xf32>
    %27 = vector.extract_strided_slice %13 {offsets = [0, 0], sizes = [8, 32], strides = [1, 1]} : vector<8x128xf32> to vector<8x32xf32>
    %28 = vector.extract_strided_slice %26 {offsets = [0, 0], sizes = [8, 32], strides = [1, 1]} : vector<8x96xf32> to vector<8x32xf32>
    %29 = arith.addf %27, %28 : vector<8x32xf32>
    %30 = arith.negf %29 : vector<8x32xf32>
    %31 = math.exp %30 : vector<8x32xf32>
    %cst_15 = arith.constant 1.000000e+00 : f32
    %32 = vector.broadcast %cst_15 : f32 to vector<8x32xf32>
    %33 = arith.addf %32, %31 : vector<8x32xf32>
    %34 = arith.divf %32, %33 : vector<8x32xf32>
    %35 = vector.extract_strided_slice %13 {offsets = [0, 32], sizes = [8, 32], strides = [1, 1]} : vector<8x128xf32> to vector<8x32xf32>
    %36 = vector.extract_strided_slice %26 {offsets = [0, 32], sizes = [8, 32], strides = [1, 1]} : vector<8x96xf32> to vector<8x32xf32>
    %37 = arith.addf %35, %36 : vector<8x32xf32>
    %38 = arith.negf %37 : vector<8x32xf32>
    %39 = math.exp %38 : vector<8x32xf32>
    %cst_16 = arith.constant 1.000000e+00 : f32
    %40 = vector.broadcast %cst_16 : f32 to vector<8x32xf32>
    %41 = arith.addf %40, %39 : vector<8x32xf32>
    %42 = arith.divf %40, %41 : vector<8x32xf32>
    %43 = vector.extract_strided_slice %13 {offsets = [0, 64], sizes = [8, 32], strides = [1, 1]} : vector<8x128xf32> to vector<8x32xf32>
    %44 = vector.extract_strided_slice %26 {offsets = [0, 64], sizes = [8, 32], strides = [1, 1]} : vector<8x96xf32> to vector<8x32xf32>
    %45 = arith.mulf %34, %44 : vector<8x32xf32>
    %46 = arith.addf %43, %45 : vector<8x32xf32>
    %47 = math.tanh %46 : vector<8x32xf32>
    %cst_17 = arith.constant 1.000000e+00 : f32
    %48 = vector.broadcast %cst_17 : f32 to vector<8x32xf32>
    %49 = arith.subf %48, %42 : vector<8x32xf32>
    %50 = arith.mulf %49, %47 : vector<8x32xf32>
    %51 = arith.mulf %42, %20 : vector<8x32xf32>
    %52 = arith.addf %50, %51 : vector<8x32xf32>
    %53 = arith.truncf %52 : vector<8x32xf32> to vector<8x32xbf16>
    %c0_18 = arith.constant 0 : index
    %c0_19 = arith.constant 0 : index
    %54 = vector.load %arg7[%c0_18, %c0_19] : memref<32x32xbf16, #tpu.memory_space<vmem>>, vector<32x32xbf16>
    %cst_20 = arith.constant dense<0.000000e+00> : vector<8x32xf32>
    %55 = tpu.matmul %53, %54, %cst_20 {dimension_numbers = #tpu.dot_dimension_numbers<[1], [0], [0], [1], [0, 0, 1, 1], [], []>} : vector<8x32xbf16>, vector<32x32xbf16>, vector<8x32xf32> -> vector<8x32xf32>
    %c0_21 = arith.constant 0 : index
    %c0_22 = arith.constant 0 : index
    %56 = vector.load %arg8[%c0_21, %c0_22] : memref<1x32xf32, #tpu.memory_space<vmem>>, vector<1x32xf32>
    %57 = vector.broadcast %56 : vector<1x32xf32> to vector<8x32xf32>
    %58 = arith.addf %55, %57 : vector<8x32xf32>
    %59 = arith.negf %58 : vector<8x32xf32>
    %60 = math.exp %59 : vector<8x32xf32>
    %cst_23 = arith.constant 1.000000e+00 : f32
    %61 = vector.broadcast %cst_23 : f32 to vector<8x32xf32>
    %62 = arith.addf %61, %60 : vector<8x32xf32>
    %63 = arith.divf %61, %62 : vector<8x32xf32>
    %64 = arith.mulf %52, %63 : vector<8x32xf32>
    %c0_24 = arith.constant 0 : index
    %c0_25 = arith.constant 0 : index
    %c0_26 = arith.constant 0 : index
    %65 = vector.load %arg9[%c0_24, %c0_25, %c0_26] : memref<1x8x32xf32, #tpu.memory_space<vmem>>, vector<1x8x32xf32>
    %66 = vector.shape_cast %65 : vector<1x8x32xf32> to vector<8x32xf32>
    %67 = vector.shape_cast %64 : vector<8x32xf32> to vector<1x8x32xf32>
    tpu.vector_store %arg9[%c0_24, %c0_25, %c0_26], %67 {strides = array<i32>} : memref<1x8x32xf32, #tpu.memory_space<vmem>>, vector<1x8x32xf32>,
    %c0_27 = arith.constant 0 : index
    %c0_28 = arith.constant 0 : index
    %68 = vector.load %arg10[%c0_27, %c0_28] : memref<8x32xf32, #tpu.memory_space<vmem>>, vector<8x32xf32>
    tpu.vector_store %arg10[%c0_27, %c0_28], %64 {strides = array<i32>} : memref<8x32xf32, #tpu.memory_space<vmem>>, vector<8x32xf32>,
    return
  }
  func.func @transform_0(%arg0: i32) -> (i32, i32, i32) {
    %c0_i32 = arith.constant 0 : i32
    %c0_i32_0 = arith.constant 0 : i32
    %c0_i32_1 = arith.constant 0 : i32
    return %arg0, %c0_i32, %c0_i32_0 : i32, i32, i32
  }
  func.func @transform_1(%arg0: i32) -> (i32, i32) {
    %c0_i32 = arith.constant 0 : i32
    %c0_i32_0 = arith.constant 0 : i32
    %c0_i32_1 = arith.constant 0 : i32
    return %c0_i32, %c0_i32_0 : i32, i32
  }
  func.func @transform_2(%arg0: i32) -> (i32, i32) {
    %c0_i32 = arith.constant 0 : i32
    %c0_i32_0 = arith.constant 0 : i32
    %c0_i32_1 = arith.constant 0 : i32
    return %c0_i32, %c0_i32_0 : i32, i32
  }
  func.func @transform_3(%arg0: i32) -> (i32, i32) {
    %c0_i32 = arith.constant 0 : i32
    %c0_i32_0 = arith.constant 0 : i32
    %c0_i32_1 = arith.constant 0 : i32
    return %c0_i32, %c0_i32_0 : i32, i32
  }
  func.func @transform_4(%arg0: i32) -> (i32, i32) {
    %c0_i32 = arith.constant 0 : i32
    %c0_i32_0 = arith.constant 0 : i32
    %c0_i32_1 = arith.constant 0 : i32
    return %c0_i32, %c0_i32_0 : i32, i32
  }
  func.func @transform_5(%arg0: i32) -> (i32, i32) {
    %c0_i32 = arith.constant 0 : i32
    %c0_i32_0 = arith.constant 0 : i32
    %c0_i32_1 = arith.constant 0 : i32
    return %c0_i32, %c0_i32_0 : i32, i32
  }
  func.func @transform_6(%arg0: i32) -> (i32, i32) {
    %c0_i32 = arith.constant 0 : i32
    %c0_i32_0 = arith.constant 0 : i32
    %c0_i32_1 = arith.constant 0 : i32
    return %c0_i32, %c0_i32_0 : i32, i32
  }
  func.func @transform_7(%arg0: i32) -> (i32, i32) {
    %c0_i32 = arith.constant 0 : i32
    %c0_i32_0 = arith.constant 0 : i32
    %c0_i32_1 = arith.constant 0 : i32
    return %c0_i32, %c0_i32_0 : i32, i32
  }
  func.func @transform_8(%arg0: i32) -> (i32, i32, i32) {
    %c0_i32 = arith.constant 0 : i32
    %c0_i32_0 = arith.constant 0 : i32
    %c0_i32_1 = arith.constant 0 : i32
    return %arg0, %c0_i32, %c0_i32_0 : i32, i32, i32
  }
}

</mosaic_0001>

<llo_original>
// kernel: tpu_custom_call.1
$region0: #{tpu_custom_call.1}
  #allocation0 [shape = 'u32[]', space=smem, size = 0x4, offset = 0x4, fixed_abs, tag = 'smem constant byte address 0x4 - core index']
  #allocation1 [shape = 'u32[144,128]{1,0:T(1,128)}', space=vmem, size = 0x12000, scoped, tag = 'internal scratch']
  #allocation2 [shape = 'f32[8,32]{1,0:T(8,128)}', space=vmem, size = 0x1000, scoped, tag = 'scratch operand']
  %s0 = inlined_call_operand.hbm [shape: f32[1,8,64], index: 0, kind: input, shape index: {}]
  %s1 = inlined_call_operand.hbm [shape: f32[8,32], index: 1, kind: input, shape index: {}]
  %s2 = inlined_call_operand.hbm [shape: bf16[96,128], index: 2, kind: input, shape index: {}]
  %s3 = inlined_call_operand.vmem [shape: f32[1,128], index: 3, kind: input, shape index: {}]
  %s4 = inlined_call_operand.hbm [shape: bf16[32,96], index: 4, kind: input, shape index: {}]
  %s5 = inlined_call_operand.vmem [shape: f32[1,96], index: 5, kind: input, shape index: {}]
  %s6 = inlined_call_operand.vmem [shape: bf16[32,32], index: 6, kind: input, shape index: {}]
  %s7 = inlined_call_operand.vmem [shape: f32[1,32], index: 7, kind: input, shape index: {}]
  %s8 = inlined_call_operand.hbm [shape: f32[1,8,32], index: 8, kind: output, shape index: {}]
  %s9 = sld [smem:[#allocation0]]
  $region62: #{tpu_custom_call.1} parent=0
    _
  %s11 = ssub.s32 1, %s9
  %s12 = scalar_select 0, %s11, %s9
  $region1: #{tpu_custom_call.1} parent=0
    #allocation3 [shape = 'u8[4096]{0}', space=vmem, size = 0x1000, scoped, tag = 'input window, operand 0, single buffered']
    #allocation4 [shape = 's32[1]{0}', space=sflag, size = 0x4, scoped, tag = 'scoped memory for tpu_custom_call.1']
    #allocation5 [shape = 's32[1]{0}', space=sflag, size = 0x4, scoped, tag = 'scoped memory for tpu_custom_call.1']
    #allocation6 [shape = 'u8[4096]{0}', space=vmem, size = 0x1000, scoped, tag = 'input window, operand 1, single buffered']
    #allocation7 [shape = 's32[1]{0}', space=sflag, size = 0x4, scoped, tag = 'scoped memory for tpu_custom_call.1']
    #allocation8 [shape = 'u8[24576]{0}', space=vmem, size = 0x6000, scoped, tag = 'input window, operand 2, single buffered']
    #allocation9 [shape = 'u8[8192]{0}', space=vmem, size = 0x2000, scoped, tag = 'input window, operand 4, single buffered']
    #allocation10 [shape = 's32[1]{0}', space=sflag, size = 0x4, scoped, tag = 'scoped memory for tpu_custom_call.1']
    #allocation11 [shape = 'u8[4096]{0}', space=vmem, size = 0x1000, scoped, tag = 'output window, operand 0, single buffered']
    %13 = vsyncpa [#allocation4], 0
    %14 = vsyncpa [#allocation7], 0
    %15 = vsyncpa [#allocation10], 0
    %16 = vsyncpa [#allocation5], 0
    // Predicated region
    $region2: #{tpu_custom_call.1} parent=1 // pred_check
      _
    $region3: #{tpu_custom_call.1} parent=1 // pred_check_branch
      %18 = sbr.rel (0) target = $region5
    $region4: #{tpu_custom_call.1} parent=1 // pred_region
      %s20 = ssub.s32 128, 128
      %21 = vsyncadd [#allocation4], %s20
      %s23 = sshll.u32 [#allocation3], 4
      %s24 = int_to_ptr.vmem [resolvable:$true] %s23
      %26 = dma.hbm_to_vmem [thread:$0]  %s0, 128, %s24, [#allocation4]
    $region5: #{tpu_custom_call.1} parent=1 // pred_fallthru
      _
    // Predicated region
    $region6: #{tpu_custom_call.1} parent=1 // pred_check
      _
    $region7: #{tpu_custom_call.1} parent=1 // pred_check_branch
      %28 = sbr.rel (0) target = $region9
    $region8: #{tpu_custom_call.1} parent=1 // pred_region
      %s30 = ssub.s32 128, 128
      %31 = vsyncadd [#allocation7], %s30
      %s33 = sshll.u32 [#allocation6], 4
      %s34 = int_to_ptr.vmem [resolvable:$true] %s33
      %36 = dma.hbm_to_vmem [thread:$0]  %s1, 128, %s34, [#allocation7]
    $region9: #{tpu_custom_call.1} parent=1 // pred_fallthru
      _
    // Predicated region
    $region10: #{tpu_custom_call.1} parent=1 // pred_check
      _
    $region11: #{tpu_custom_call.1} parent=1 // pred_check_branch
      %38 = sbr.rel (0) target = $region13
    $region12: #{tpu_custom_call.1} parent=1 // pred_region
      %s40 = ssub.s32 768, 768
      %41 = vsyncadd [#allocation7], %s40
      %s42 = sshll.u32 [#allocation8], 4
      %s43 = int_to_ptr.vmem [resolvable:$true] %s42
      %48 = dma.hbm_to_vmem [thread:$0]  %s2, 768, %s43, [#allocation7], 64, 64, 4
    $region13: #{tpu_custom_call.1} parent=1 // pred_fallthru
      _
    // Predicated region
    $region14: #{tpu_custom_call.1} parent=1 // pred_check
      _
    $region15: #{tpu_custom_call.1} parent=1 // pred_check_branch
      %50 = sbr.rel (0) target = $region17
    $region16: #{tpu_custom_call.1} parent=1 // pred_region
      _
    $region17: #{tpu_custom_call.1} parent=1 // pred_fallthru
      _
    // Predicated region
    $region18: #{tpu_custom_call.1} parent=1 // pred_check
      _
    $region19: #{tpu_custom_call.1} parent=1 // pred_check_branch
      %52 = sbr.rel (0) target = $region21
    $region20: #{tpu_custom_call.1} parent=1 // pred_region
      %s54 = ssub.s32 256, 256
      %55 = vsyncadd [#allocation10], %s54
      %s56 = sshll.u32 [#allocation9], 4
      %s57 = int_to_ptr.vmem [resolvable:$true] %s56
      %62 = dma.hbm_to_vmem [thread:$0]  %s4, 256, %s57, [#allocation10], 64, 64, 4
    $region21: #{tpu_custom_call.1} parent=1 // pred_fallthru
      _
    // Predicated region
    $region22: #{tpu_custom_call.1} parent=1 // pred_check
      _
    $region23: #{tpu_custom_call.1} parent=1 // pred_check_branch
      %64 = sbr.rel (0) target = $region25
    $region24: #{tpu_custom_call.1} parent=1 // pred_region
      _
    $region25: #{tpu_custom_call.1} parent=1 // pred_fallthru
      _
    // Predicated region
    $region26: #{tpu_custom_call.1} parent=1 // pred_check
      _
    $region27: #{tpu_custom_call.1} parent=1 // pred_check_branch
      %66 = sbr.rel (0) target = $region29
    $region28: #{tpu_custom_call.1} parent=1 // pred_region
      _
    $region29: #{tpu_custom_call.1} parent=1 // pred_fallthru
      _
    // Predicated region
    $region30: #{tpu_custom_call.1} parent=1 // pred_check
      _
    $region31: #{tpu_custom_call.1} parent=1 // pred_check_branch
      %68 = sbr.rel (0) target = $region33
    $region32: #{tpu_custom_call.1} parent=1 // pred_region
      _
    $region33: #{tpu_custom_call.1} parent=1 // pred_fallthru
      _
    // Predicated region
    $region34: #{tpu_custom_call.1} parent=1 // pred_check
      _
    $region35: #{tpu_custom_call.1} parent=1 // pred_check_branch
      %70 = sbr.rel (0) target = $region37
    $region36: #{tpu_custom_call.1} parent=1 // pred_region
      %71 = dma.done [#allocation4], 128
    $region37: #{tpu_custom_call.1} parent=1 // pred_fallthru
      _
    // Predicated region
    $region38: #{tpu_custom_call.1} parent=1 // pred_check
      _
    $region39: #{tpu_custom_call.1} parent=1 // pred_check_branch
      %73 = sbr.rel (0) target = $region41
    $region40: #{tpu_custom_call.1} parent=1 // pred_region
      %74 = dma.done [#allocation7], 128
    $region41: #{tpu_custom_call.1} parent=1 // pred_fallthru
      _
    // Predicated region
    $region42: #{tpu_custom_call.1} parent=1 // pred_check
      _
    $region43: #{tpu_custom_call.1} parent=1 // pred_check_branch
      %76 = sbr.rel (0) target = $region45
    $region44: #{tpu_custom_call.1} parent=1 // pred_region
      %77 = dma.done [#allocation7], 768
    $region45: #{tpu_custom_call.1} parent=1 // pred_fallthru
      _
    // Predicated region
    $region46: #{tpu_custom_call.1} parent=1 // pred_check
      _
    $region47: #{tpu_custom_call.1} parent=1 // pred_check_branch
      %79 = sbr.rel (0) target = $region49
    $region48: #{tpu_custom_call.1} parent=1 // pred_region
      %80 = dma.done [#allocation10], 256
    $region49: #{tpu_custom_call.1} parent=1 // pred_fallthru
      _
    %p82 = scmp.eq.s32.totalorder 0, 0
    // Predicated region
    $region50: #{tpu_custom_call.1} parent=1 // pred_check
      %p83 = pneg %p82
    $region51: #{tpu_custom_call.1} parent=1 // pred_check_branch
      %85 = sbr.rel (%p83) target = $region53
    $region52: #{tpu_custom_call.1} parent=1 // pred_region
      %v86 = vld [vmem:[#allocation6] sm:$0xff]
      %vm87 = vcmask 261120
      %88 = vst.msk [vmem:[#allocation2] sm:$0xff] %vm87, %v86
    $region53: #{tpu_custom_call.1} parent=1 // pred_fallthru
      _
    %v89 = vld [vmem:[#allocation3] sm:$0xff]
    %v90 = vld [vmem:[#allocation2] sm:$0xff]
    %v91 = vpack.c.bf16 %v89, %v89
    %v92 = vpack.c.bf16 %v90, %v90
    %94 = vrot.lane.b32.xlu0 %v92, 64
    %v95 = vpop.permute.xlu0 %94
    %vm96 = vcmask 523264
    %v99 = vsel %vm96, %v91, %v95
    %v100 = vld [vmem:[#allocation8] sm:$0xf]
    %v101 = vld [vmem:[#allocation8 + $0x4] sm:$0xf]
    %v102 = vld [vmem:[#allocation8 + $0x8] sm:$0xf]
    %v103 = vld [vmem:[#allocation8 + $0xc] sm:$0xf]
    %v104 = vld [vmem:[#allocation8 + $0x10] sm:$0xf]
    %v105 = vld [vmem:[#allocation8 + $0x14] sm:$0xf]
    %v106 = vld [vmem:[#allocation8 + $0x18] sm:$0xf]
    %v107 = vld [vmem:[#allocation8 + $0x1c] sm:$0xf]
    %v108 = vld [vmem:[#allocation8 + $0x20] sm:$0xf]
    %v109 = vld [vmem:[#allocation8 + $0x24] sm:$0xf]
    %v110 = vld [vmem:[#allocation8 + $0x28] sm:$0xf]
    %v111 = vld [vmem:[#allocation8 + $0x2c] sm:$0xf]
    %v112 = vld [vmem:[%s3] sm:$0x1]
    %v114 = vlaneseq
    %v115 = vshrl.u32 %v114, 7
    %v116 = vsub.s32 0, %v115
    %v117 = vrot.slane %v112, %v116
    %v131 = vunpack.c.l.b16 %v100
    %v132 = vunpack.c.l.b16 %v101
    %v133 = vunpack.c.l.b16 %v102
    %v134 = vunpack.c.l.b16 %v103
    %v135 = vunpack.c.l.b16 %v104
    %v136 = vunpack.c.l.b16 %v105
    %v137 = vunpack.c.l.b16 %v106
    %v138 = vunpack.c.l.b16 %v107
    %v139 = vunpack.c.l.b16 %v108
    %v140 = vunpack.c.l.b16 %v109
    %v141 = vunpack.c.l.b16 %v110
    %v142 = vunpack.c.l.b16 %v111
    %v143 = vpack.c.b16 %v132, %v131
    %v144 = vpack.c.b16 %v134, %v133
    %v145 = vpack.c.b16 %v136, %v135
    %v146 = vpack.c.b16 %v138, %v137
    %v147 = vpack.c.b16 %v140, %v139
    %v148 = vpack.c.b16 %v142, %v141
    %vm155 = vcmask 785408
    %v156 = vsel %vm155, %v99, 0
    %158 = vmatprep.subr.bf16.mxu0 0
    %159 = vmatpush1.bf16.msra.mxu0 %v143
    %160 = vmatprep.subr.bf16.mxu0 0
    %161 = vmatpush1.bf16.msra.mxu0 %v144
    %162 = vmatprep.subr.bf16.mxu0 0
    %163 = vmatpush1.bf16.msra.mxu0 %v145
    %164 = vmatprep.subr.bf16.mxu0 0
    %165 = vmatpush1.bf16.msra.mxu0 %v146
    %166 = vmatprep.subr.bf16.mxu0 0
    %167 = vmatpush1.bf16.msra.mxu0 %v147
    %168 = vmatprep.subr.bf16.mxu0 0
    %169 = vmatpush1.bf16.msra.mxu0 %v148
    %170 = vmatprep.subr.bf16.mxu0 0
    %171 = vmatpush1.bf16.msra.mxu0 0
    %172 = vmatprep.subr.bf16.mxu0 0
    %173 = vmatpush1.bf16.msra.mxu0 0
    %174 = vmatprep.subr.bf16.mxu0 0
    %175 = vmatpush1.bf16.msra.mxu0 0
    %176 = vmatprep.subr.bf16.mxu0 0
    %177 = vmatpush1.bf16.msra.mxu0 0
    %178 = vmatprep.subr.bf16.mxu0 0
    %179 = vmatpush1.bf16.msra.mxu0 0
    %180 = vmatprep.subr.bf16.mxu0 0
    %181 = vmatpush1.bf16.msra.mxu0 0
    %182 = vmatprep.subr.bf16.mxu0 0
    %183 = vmatpush1.bf16.msra.mxu0 0
    %184 = vmatprep.subr.bf16.mxu0 0
    %185 = vmatpush1.bf16.msra.mxu0 0
    %186 = vmatprep.subr.bf16.mxu0 0
    %187 = vmatpush1.bf16.msra.mxu0 0
    %188 = vmatprep.subr.bf16.mxu0 0
    %189 = vmatpush1.bf16.msra.mxu0 0
    %190 = vmatprep.mubr.bf16.mxu0 0
    %191 = vmatmul.mubr.bf16.gmra.mrb[0].mxu0 %v156
    %v192 = vpop.f32.mrb[0].mxu0
    %v193 = vadd.f32 %v117, %v192
    %v194 = vpop.f32.mrb[0].mxu0
    %v195 = vpop.f32.mrb[0].mxu0
    %v196 = vpop.f32.mrb[0].mxu0
    %197 = vdwg.mxu0
    %v198 = vxor.u32 %v193, 2147483648
    %v199 = vmul.f32 %v198, 1.442695
    %v200 = vpow.pop %v199
    %v201 = vadd.f32 %v200, 1.0
    %v202 = vrcp.pop %v201
    %v203 = vmul.f32 1.0, %v202
    %205 = vrot.lane.b32.xlu0 %v203, 32
    %v206 = vpop.permute.xlu0 %205
    %v208 = vmul.f32 %v90, %v206
    %v209 = vpack.c.bf16 %v208, %v208
    %v210 = vld [vmem:[#allocation9] sm:$0xf]
    %v211 = vld [vmem:[#allocation9 + $0x4] sm:$0xf]
    %v212 = vld [vmem:[#allocation9 + $0x8] sm:$0xf]
    %v213 = vld [vmem:[#allocation9 + $0xc] sm:$0xf]
    %v214 = vld [vmem:[%s5] sm:$0x1]
    %v216 = vlaneseq
    %v217 = vshrl.u32 %v216, 7
    %v218 = vsub.s32 0, %v217
    %v219 = vrot.slane %v214, %v218
    %v225 = vunpack.c.l.b16 %v210
    %v226 = vunpack.c.l.b16 %v211
    %v227 = vunpack.c.l.b16 %v212
    %v228 = vunpack.c.l.b16 %v213
    %v229 = vpack.c.b16 %v226, %v225
    %v230 = vpack.c.b16 %v228, %v227
    %vm233 = vcmask 261120
    %v235 = vsel %vm233, %v209, 0
    %237 = vmatprep.subr.bf16.mxu0 0
    %238 = vmatpush1.bf16.msra.mxu0 %v229
    %239 = vmatprep.subr.bf16.mxu0 0
    %240 = vmatpush1.bf16.msra.mxu0 %v230
    %241 = vmatprep.subr.bf16.mxu0 0
    %242 = vmatpush1.bf16.msra.mxu0 0
    %243 = vmatprep.subr.bf16.mxu0 0
    %244 = vmatpush1.bf16.msra.mxu0 0
    %245 = vmatprep.subr.bf16.mxu0 0
    %246 = vmatpush1.bf16.msra.mxu0 0
    %247 = vmatprep.subr.bf16.mxu0 0
    %248 = vmatpush1.bf16.msra.mxu0 0
    %249 = vmatprep.subr.bf16.mxu0 0
    %250 = vmatpush1.bf16.msra.mxu0 0
    %251 = vmatprep.subr.bf16.mxu0 0
    %252 = vmatpush1.bf16.msra.mxu0 0
    %253 = vmatprep.subr.bf16.mxu0 0
    %254 = vmatpush1.bf16.msra.mxu0 0
    %255 = vmatprep.subr.bf16.mxu0 0
    %256 = vmatpush1.bf16.msra.mxu0 0
    %257 = vmatprep.subr.bf16.mxu0 0
    %258 = vmatpush1.bf16.msra.mxu0 0
    %259 = vmatprep.subr.bf16.mxu0 0
    %260 = vmatpush1.bf16.msra.mxu0 0
    %261 = vmatprep.subr.bf16.mxu0 0
    %262 = vmatpush1.bf16.msra.mxu0 0
    %263 = vmatprep.subr.bf16.mxu0 0
    %264 = vmatpush1.bf16.msra.mxu0 0
    %265 = vmatprep.subr.bf16.mxu0 0
    %266 = vmatpush1.bf16.msra.mxu0 0
    %267 = vmatprep.subr.bf16.mxu0 0
    %268 = vmatpush1.bf16.msra.mxu0 0
    %269 = vmatprep.mubr.bf16.mxu0 0
    %270 = vmatmul.mubr.bf16.gmra.mrb[0].mxu0 %v235
    %v271 = vpop.f32.mrb[0].mxu0
    %v272 = vadd.f32 %v219, %v271
    %v273 = vpop.f32.mrb[0].mxu0
    %v274 = vpop.f32.mrb[0].mxu0
    %v275 = vpop.f32.mrb[0].mxu0
    %276 = vdwg.mxu0
    %v277 = vadd.f32 %v193, %v272
    %v278 = vxor.u32 %v277, 2147483648
    %v279 = vmul.f32 %v278, 1.442695
    %v280 = vpow.pop %v279
    %v281 = vadd.f32 %v280, 1.0
    %v282 = vrcp.pop %v281
    %v283 = vmul.f32 1.0, %v282
    %285 = vrot.lane.b32.xlu0 %v272, 64
    %v286 = vpop.permute.xlu0 %285
    %v288 = vmul.f32 %v283, %v286
    %290 = vrot.lane.b32.xlu0 %v288, 64
    %v291 = vpop.permute.xlu0 %290
    %v293 = vadd.f32 %v193, %v291
    %v294 = vtanh.pop %v293
    %v295 = vsub.f32 1.0, %v283
    %297 = vrot.lane.b32.xlu0 %v294, 96
    %v298 = vpop.permute.xlu0 %297
    %v300 = vmul.f32 %v295, %v298
    %302 = vrot.lane.b32.xlu0 %v208, 32
    %v303 = vpop.permute.xlu0 %302
    %v305 = vmul.f32 %v283, %v303
    %v306 = vadd.f32 %v300, %v305
    %v307 = vpack.c.bf16 %v306, %v306
    %v308 = vld [vmem:[%s6] sm:$0xf]
    %v309 = vld [vmem:[%s6 + $0x4] sm:$0xf]
    %v310 = vld [vmem:[%s6 + $0x8] sm:$0xf]
    %v311 = vld [vmem:[%s6 + $0xc] sm:$0xf]
    %v312 = vld [vmem:[%s7] sm:$0x1]
    %v314 = vlaneseq
    %v315 = vshrl.u32 %v314, 7
    %v316 = vsub.s32 0, %v315
    %v317 = vrot.slane %v312, %v316
    %320 = vrot.lane.b32.xlu0 %v307, 96
    %v321 = vpop.permute.xlu0 %320
    %v326 = vunpack.c.l.b16 %v308
    %v327 = vunpack.c.l.b16 %v309
    %v328 = vunpack.c.l.b16 %v310
    %v329 = vunpack.c.l.b16 %v311
    %v330 = vpack.c.b16 %v327, %v326
    %v331 = vpack.c.b16 %v329, %v328
    %v335 = vsel %vm233, %v321, 0
    %337 = vmatprep.subr.bf16.mxu0 0
    %338 = vmatpush1.bf16.msra.mxu0 %v330
    %339 = vmatprep.subr.bf16.mxu0 0
    %340 = vmatpush1.bf16.msra.mxu0 %v331
    %341 = vmatprep.subr.bf16.mxu0 0
    %342 = vmatpush1.bf16.msra.mxu0 0
    %343 = vmatprep.subr.bf16.mxu0 0
    %344 = vmatpush1.bf16.msra.mxu0 0
    %345 = vmatprep.subr.bf16.mxu0 0
    %346 = vmatpush1.bf16.msra.mxu0 0
    %347 = vmatprep.subr.bf16.mxu0 0
    %348 = vmatpush1.bf16.msra.mxu0 0
    %349 = vmatprep.subr.bf16.mxu0 0
    %350 = vmatpush1.bf16.msra.mxu0 0
    %351 = vmatprep.subr.bf16.mxu0 0
    %352 = vmatpush1.bf16.msra.mxu0 0
    %353 = vmatprep.subr.bf16.mxu0 0
    %354 = vmatpush1.bf16.msra.mxu0 0
    %355 = vmatprep.subr.bf16.mxu0 0
    %356 = vmatpush1.bf16.msra.mxu0 0
    %357 = vmatprep.subr.bf16.mxu0 0
    %358 = vmatpush1.bf16.msra.mxu0 0
    %359 = vmatprep.subr.bf16.mxu0 0
    %360 = vmatpush1.bf16.msra.mxu0 0
    %361 = vmatprep.subr.bf16.mxu0 0
    %362 = vmatpush1.bf16.msra.mxu0 0
    %363 = vmatprep.subr.bf16.mxu0 0
    %364 = vmatpush1.bf16.msra.mxu0 0
    %365 = vmatprep.subr.bf16.mxu0 0
    %366 = vmatpush1.bf16.msra.mxu0 0
    %367 = vmatprep.subr.bf16.mxu0 0
    %368 = vmatpush1.bf16.msra.mxu0 0
    %369 = vmatprep.mubr.bf16.mxu0 0
    %370 = vmatmul.mubr.bf16.gmra.mrb[0].mxu0 %v335
    %v371 = vpop.f32.mrb[0].mxu0
    %v372 = vadd.f32 %v317, %v371
    %v373 = vpop.f32.mrb[0].mxu0
    %v374 = vpop.f32.mrb[0].mxu0
    %v375 = vpop.f32.mrb[0].mxu0
    %376 = vdwg.mxu0
    %v377 = vxor.u32 %v372, 2147483648
    %v378 = vmul.f32 %v377, 1.442695
    %v379 = vpow.pop %v378
    %v380 = vadd.f32 %v379, 1.0
    %v381 = vrcp.pop %v380
    %v382 = vmul.f32 1.0, %v381
    %384 = vrot.lane.b32.xlu0 %v382, 32
    %v385 = vpop.permute.xlu0 %384
    %v387 = vmul.f32 %v306, %v385
    %389 = vrot.lane.b32.xlu0 %v387, 96
    %v390 = vpop.permute.xlu0 %389
    %392 = vst.msk [vmem:[#allocation11] sm:$0xff] %vm233, %v390
    %393 = vst.msk [vmem:[#allocation2] sm:$0xff] %vm233, %v390
    // Predicated region
    $region54: #{tpu_custom_call.1} parent=1 // pred_check
      _
    $region55: #{tpu_custom_call.1} parent=1 // pred_check_branch
      %395 = sbr.rel (0) target = $region57
    $region56: #{tpu_custom_call.1} parent=1 // pred_region
      %s397 = ssub.s32 128, 128
      %398 = vsyncadd [#allocation5], %s397
      %s400 = sshll.u32 [#allocation11], 4
      %s401 = int_to_ptr.vmem [resolvable:$true] %s400
      %403 = dma.vmem_to_hbm [thread:$0]  %s401, 128, %s8, [#allocation5]
    $region57: #{tpu_custom_call.1} parent=1 // pred_fallthru
      _
    // Predicated region
    $region58: #{tpu_custom_call.1} parent=1 // pred_check
      _
    $region59: #{tpu_custom_call.1} parent=1 // pred_check_branch
      %405 = sbr.rel (0) target = $region61
    $region60: #{tpu_custom_call.1} parent=1 // pred_region
      %406 = dma.done [#allocation5], 128
    $region61: #{tpu_custom_call.1} parent=1 // pred_fallthru
      _
    %407 = vsyncpa [#allocation4], 1
    %408 = vsyncpa [#allocation7], 1
    %409 = vsyncpa [#allocation10], 1
    %410 = vsyncpa [#allocation5], 1

</llo_original>
